<compile_context>
chip_gen: v5e
topology: v5e:2x2
jax: 0.10.0
libtpu: 0.0.40
codegen_flags: <defaults>
</compile_context>

<pallas_src>
import functools

import jax
import jax.numpy as jnp
from jax import lax
from jax.experimental import pallas as pl
from jax.experimental.pallas import tpu as pltpu

_NEG_BIG = -1e30   # plain Python float (a jnp scalar here would become a captured trace constant)


def _tpu_params():
    """(tensorcores_per_chip, vmem_capacity_bytes) with safe fallbacks (CPU / interpret)."""
    vmem_cap = 128 * 1024 * 1024
    n_cores = 1
    try:
        vmem_cap = int(pltpu.get_tpu_info().vmem_capacity_bytes)
    except Exception:
        pass
    try:
        d = jax.devices()[0]
        if d.platform == "tpu":
            nc = getattr(d, "num_cores", None)
            if nc:
                n_cores = int(nc)
            else:
                kind = str(getattr(d, "device_kind", "")).lower()
                if ("v4" in kind) or ("v5p" in kind) or ("7" in kind):
                    n_cores = 2
    except Exception:
        pass
    return max(1, min(n_cores, 2)), vmem_cap


def _choose_tiles(batch, n_classes, itemsize, vmem_cap, block_rows=None):
    """Pick (tb, tc, nck): row tile, class chunk, #class chunks."""
    TB_MAX = 1024
    TC_MAX = 2048                                      # lane-dense class chunk (multiple of 128)
    sub = {4: 8, 2: 16, 1: 32}.get(itemsize, 8)        # dtype-aware sublane multiple
    # feature-block byte budget: ~6.4 MiB on v7x (64 MiB VMEM), 12 MiB on v5e/v6e (128 MiB VMEM)
    budget = max(4 << 20, min(12 << 20, vmem_cap // 10))

    tc = n_classes if n_classes <= TC_MAX else TC_MAX
    nck = -(-n_classes // tc)

    tb = budget // max(1, tc * itemsize)
    tb = min(TB_MAX, tb)
    tb = min(tb, -(-batch // sub) * sub)               # never more rows than needed
    if block_rows is not None:
        tb = min(tb, max(sub, block_rows))
    tb = max(sub, (tb // sub) * sub)
    return tb, tc, nck


def _ce_kernel(feat_ref, lbl_ref, out_ref,
               m_ref, l_ref, pick_ref, acc_ref,
               *, n_rows, n_classes, tb, tc, nbpc, nck, mask_cols, mask_rows):
    c = pl.program_id(0)   # core / partial-sum index        (parallel)
    j = pl.program_id(1)   # row block within this core      (arbitrary)
    k = pl.program_id(2)   # class chunk                     (arbitrary)

    # zero this core's per-row loss accumulator at the start of its work
    @pl.when(jnp.logical_and(j == 0, k == 0))
    def _():
        acc_ref[...] = jnp.zeros_like(acc_ref)

    bc = c * nbpc + j                          # global row-block index (unclamped)
    lbl = lbl_ref[...]                         # (tb, 1) int32, this row block's labels
    x = feat_ref[...].astype(jnp.float32)      # (tb, tc) logits chunk

    if mask_rows:
        # last row block statically overhangs the feature array: kill garbage rows
        rows0 = bc * tb + lax.broadcasted_iota(jnp.int32, (tb, 1), 0)
        x = jnp.where(rows0 < n_rows, x, _NEG_BIG)

    col = lax.broadcasted_iota(jnp.int32, (tb, tc), 1)   # LOCAL column index
    lbl_loc = lbl - k * tc                               # (tb, 1) shift instead of (tb,tc) add

    def pick_contrib(xv):
        # labelled-class logit (0 if that class is not in this chunk; invalid labels never match)
        return jnp.sum(jnp.where(col == lbl_loc, xv, 0.0), axis=-1, keepdims=True)

    def lse_init(xv):
        m = jnp.max(xv, axis=-1, keepdims=True)
        m_ref[...] = m
        l_ref[...] = jnp.sum(jnp.exp(xv - m), axis=-1, keepdims=True)
        pick_ref[...] = pick_contrib(xv)

    def lse_update(xv):
        m_old = m_ref[...]
        m_new = jnp.maximum(m_old, jnp.max(xv, axis=-1, keepdims=True))
        l_ref[...] = (l_ref[...] * jnp.exp(m_old - m_new)
                      + jnp.sum(jnp.exp(xv - m_new), axis=-1, keepdims=True))
        m_ref[...] = m_new
        pick_ref[...] += pick_contrib(xv)

    if nck == 1:
        xin = x
        if mask_cols:                                     # defensive; not reachable by tiling
            xin = jnp.where(col < n_classes, x, _NEG_BIG)
        lse_init(xin)
    else:
        @pl.when(k == 0)                                  # first chunk: no correction against l=0
        def _():
            lse_init(x)

        if mask_cols:
            @pl.when(jnp.logical_and(k > 0, k < nck - 1))  # interior chunks: no overhang mask
            def _():
                lse_update(x)

            last_lim = n_classes - (nck - 1) * tc          # static int inside this branch
            @pl.when(k == nck - 1)
            def _():
                lse_update(jnp.where(col < last_lim, x, _NEG_BIG))
        else:
            @pl.when(k > 0)
            def _():
                lse_update(x)

    # end of this row tile: fold its per-row losses into the per-core accumulator
    @pl.when(k == nck - 1)
    def _():
        lse = m_ref[...] + jnp.log(l_ref[...])             # (tb, 1)
        loss_rows = lse - pick_ref[...]                    # (tb, 1)
        rows = bc * tb + lax.broadcasted_iota(jnp.int32, (tb, 1), 0)
        valid = (rows < n_rows) & (lbl >= 0) & (lbl < n_classes)
        acc_ref[...] += jnp.where(valid, loss_rows, 0.0)

    # very last step for this core: collapse accumulator, emit 128-lane partial-sum block
    @pl.when(jnp.logical_and(j == nbpc - 1, k == nck - 1))
    def _():
        total = jnp.sum(acc_ref[...])
        lane = lax.broadcasted_iota(jnp.int32, (1, 128), 1)
        out_ref[...] = jnp.where(lane == 0, total, 0.0)


def cross_entropy(features: jax.Array, labels: jax.Array, *,
                  block_rows=None, force_cores=None) -> jax.Array:
    """Pallas equivalent of CrossEntropy().forward(features, labels=labels)."""
    B = int(labels.shape[0])
    n_feat_rows, C = (int(s) for s in features.shape)
    itemsize = jnp.dtype(features.dtype).itemsize

    n_cores, vmem_cap = _tpu_params()
    if force_cores is not None:
        n_cores = int(force_cores)

    tb, tc, nck = _choose_tiles(B, C, itemsize, vmem_cap, block_rows)
    nb_real = -(-B // tb)                       # real row blocks covering B rows
    n_cores = max(1, min(n_cores, nb_real))     # never more cores than row blocks
    nbpc = -(-nb_real // n_cores)               # row blocks per core

    l_pad = nb_real * tb                        # labels padded to whole row blocks only
    lbl = jnp.pad(labels.astype(jnp.int32), (0, l_pad - B),
                  constant_values=-1).reshape(l_pad, 1)

    mask_cols = (tc * nck != C)
    mask_rows = (nb_real * tb > n_feat_rows)    # last block reads past the feature array end

    kernel = functools.partial(
        _ce_kernel, n_rows=B, n_classes=C, tb=tb, tc=tc,
        nbpc=nbpc, nck=nck, mask_cols=mask_cols, mask_rows=mask_rows)

    # clamp fully-out-of-range duplicate blocks onto the last real block; the kernel's
    # row-id mask zeroes their contribution.
    feat_idx = lambda c, j, k: (jnp.minimum(c * nbpc + j, nb_real - 1), k)
    lbl_spec = pl.BlockSpec((tb, 1), lambda c, j, k: (jnp.minimum(c * nbpc + j, nb_real - 1), 0))
    out_spec = pl.BlockSpec((1, 128), lambda c, j, k: (0, c))       # per-core partial sum

    # scoped VMEM limit from the actual footprint (3-deep feat buffers, lane-padded labels/scratch)
    feat_bytes = 3 * tb * tc * itemsize
    lbl_bytes = 2 * tb * 128 * 4
    scr_bytes = 4 * tb * 128 * 4
    vmem_limit = int(1.25 * (feat_bytes + lbl_bytes + scr_bytes)) + (2 << 20)
    vmem_limit = int(min(max(vmem_limit, 16 << 20), vmem_cap))

    def _run(use_buffered):
        if use_buffered:
            feat_spec = pl.BlockSpec((tb, tc), feat_idx, pipeline_mode=pl.Buffered(3))
        else:
            feat_spec = pl.BlockSpec((tb, tc), feat_idx)
        return pl.pallas_call(
            kernel,
            out_shape=jax.ShapeDtypeStruct((1, n_cores * 128), jnp.float32),
            grid_spec=pltpu.PrefetchScalarGridSpec(
                num_scalar_prefetch=0,
                grid=(n_cores, nbpc, nck),
                in_specs=[feat_spec, lbl_spec],
                out_specs=out_spec,
                scratch_shapes=[
                    pltpu.VMEM((tb, 1), jnp.float32),   # running max  m
                    pltpu.VMEM((tb, 1), jnp.float32),   # running sum  l
                    pltpu.VMEM((tb, 1), jnp.float32),   # picked logit
                    pltpu.VMEM((tb, 1), jnp.float32),   # per-core loss accumulator
                ]),
            compiler_params=pltpu.CompilerParams(
                dimension_semantics=("parallel", "arbitrary", "arbitrary"),
                vmem_limit_bytes=vmem_limit),
        )(features, lbl)

    try:
        partial_out = _run(True)       # 3-deep feature pipeline (covers the finalize bubble)
    except Exception:
        partial_out = _run(False)      # fallback if Buffered pipeline_mode is unsupported

    total = jnp.sum(partial_out.reshape(n_cores, 128)[:, 0])
    # mean over non-ignored targets (ignore_index=-100 / out-of-range excluded)
    count = jnp.sum(((labels >= 0) & (labels < C)).astype(jnp.float32))
    return total / count


def _reference(features, labels):
    """Pure-JAX reference (matches F.cross_entropy mean reduction w/ ignore_index=-100)."""
    B = labels.shape[0]
    feat = features[:B].astype(jnp.float32)
    logz = jax.nn.logsumexp(feat, axis=-1)
    lbl = labels.astype(jnp.int32)
    valid = (lbl >= 0) & (lbl < feat.shape[1])
    safe = jnp.where(valid, lbl, 0)
    picked = jnp.take_along_axis(feat, safe[:, None], axis=-1)[:, 0]
    per_row = jnp.where(valid, logz - picked, 0.0)
    return jnp.sum(per_row) / jnp.sum(valid.astype(jnp.float32))


if __name__ == "__main__":
    key = jax.random.PRNGKey(0)
    k1, k2, k3, k4, k5, k6, k7, k8 = jax.random.split(key, 8)

    # 1) module-typical use: features has extra rows beyond labels (B=8, C=10, N_total=16)
    feats1 = jax.random.normal(k1, (16, 10), dtype=jnp.float32)
    lbls1 = jax.random.randint(k2, (8,), 0, 10, dtype=jnp.int32)
    out1 = cross_entropy(feats1, lbls1)
    jax.block_until_ready(out1)
    ref1 = _reference(feats1, lbls1)
    assert jnp.allclose(out1, ref1, atol=5e-4, rtol=1e-5), (out1, ref1)

    # 2) ragged batch (row overhang past the feature array) + one ignored label (-100)
    feats2 = jax.random.normal(k3, (50, 700), dtype=jnp.float32)
    lbls2 = jax.random.randint(k4, (50,), 0, 700, dtype=jnp.int32).at[3].set(-100)
    out2 = cross_entropy(feats2, lbls2)
    jax.block_until_ready(out2)
    ref2 = _reference(feats2, lbls2)
    assert jnp.allclose(out2, ref2, atol=5e-4, rtol=1e-5), (out2, ref2)

    # 3) chunked-class path (C > 2048): exercises init / interior / masked-last chunk branches
    feats3 = jax.random.normal(k5, (48, 4500), dtype=jnp.float32)
    lbls3 = jax.random.randint(k6, (48,), 0, 4500, dtype=jnp.int32)
    out3 = cross_entropy(feats3, lbls3)
    jax.block_until_ready(out3)
    ref3 = _reference(feats3, lbls3)
    assert jnp.allclose(out3, ref3, atol=5e-4, rtol=1e-5), (out3, ref3)

    # 4) multi row-block + forced 2-"core" grid: exercises clamped duplicate blocks & partial sums
    feats4 = jax.random.normal(k7, (40, 300), dtype=jnp.float32)
    lbls4 = jax.random.randint(k8, (40,), 0, 300, dtype=jnp.int32)
    out4 = cross_entropy(feats4, lbls4, block_rows=16, force_cores=2)
    jax.block_until_ready(out4)
    ref4 = _reference(feats4, lbls4)
    assert jnp.allclose(out4, ref4, atol=5e-4, rtol=1e-5), (out4, ref4)

    print("KERNEL_OK")
</pallas_src>

<mosaic_0001>
module attributes {stable_mosaic.version = 11 : i64} {
  func.func @_ce_kernel(%arg0: i32, %arg1: i32, %arg2: i32, %arg3: memref<8x10xf32, #tpu.memory_space<vmem>>, %arg4: memref<8x1xi32, #tpu.memory_space<vmem>>, %arg5: memref<1x128xf32, #tpu.memory_space<vmem>>, %arg6: memref<8x1xf32, #tpu.memory_space<vmem>>, %arg7: memref<8x1xf32, #tpu.memory_space<vmem>>, %arg8: memref<8x1xf32, #tpu.memory_space<vmem>>, %arg9: memref<8x1xf32, #tpu.memory_space<vmem>>) attributes {dimension_semantics = [#tpu.dimension_semantics<parallel>, #tpu.dimension_semantics<arbitrary>, #tpu.dimension_semantics<arbitrary>], iteration_bounds = array<i64: 1, 1, 1>, scalar_prefetch = 0 : i64, scratch_operands = 4 : i64, tpu.core_type = #tpu.core_type<tc>, window_params = [{transform_indices = @transform_0, window_bounds = array<i64: 8, 10>}, {transform_indices = @transform_1, window_bounds = array<i64: 8, 1>}, {transform_indices = @transform_2, window_bounds = array<i64: 1, 128>}]} {
    %c0_i32 = arith.constant 0 : i32
    %0 = arith.cmpi eq, %arg1, %c0_i32 : i32
    %c0_i32_0 = arith.constant 0 : i32
    %1 = arith.cmpi eq, %arg2, %c0_i32_0 : i32
    %2 = arith.andi %0, %1 : i1
    %3 = arith.extui %2 : i1 to i32
    %c0_i32_1 = arith.constant 0 : i32
    %4 = arith.cmpi ne, %3, %c0_i32_1 : i32
    scf.if %4 {
      %cst_19 = arith.constant 0.000000e+00 : f32
      %37 = vector.broadcast %cst_19 : f32 to vector<8x1xf32>
      %c0_20 = arith.constant 0 : index
      %c0_21 = arith.constant 0 : index
      %38 = vector.load %arg9[%c0_20, %c0_21] : memref<8x1xf32, #tpu.memory_space<vmem>>, vector<8x1xf32>
      tpu.vector_store %arg9[%c0_20, %c0_21], %37 {strides = array<i32>} : memref<8x1xf32, #tpu.memory_space<vmem>>, vector<8x1xf32>,
    } else {
    }
    %c1_i32 = arith.constant 1 : i32
    %5 = arith.muli %arg0, %c1_i32 : i32
    %6 = arith.addi %5, %arg1 : i32
    %c0 = arith.constant 0 : index
    %c0_2 = arith.constant 0 : index
    %7 = vector.load %arg4[%c0, %c0_2] : memref<8x1xi32, #tpu.memory_space<vmem>>, vector<8x1xi32>
    %c0_3 = arith.constant 0 : index
    %c0_4 = arith.constant 0 : index
    %8 = vector.load %arg3[%c0_3, %c0_4] : memref<8x10xf32, #tpu.memory_space<vmem>>, vector<8x10xf32>
    %9 = tpu.iota {dimensions = array<i32: 1>} : vector<8x10xi32>
    %c10_i32 = arith.constant 10 : i32
    %10 = arith.muli %arg2, %c10_i32 : i32
    %11 = vector.broadcast %10 : i32 to vector<8x1xi32>
    %12 = arith.subi %7, %11 : vector<8x1xi32>
    %cst = arith.constant dense<0xFF800000> : vector<8xf32>
    %13 = vector.multi_reduction <maximumf>, %8, %cst [1] : vector<8x10xf32> to vector<8xf32>
    %14 = vector.shape_cast %13 : vector<8xf32> to vector<8x1xf32>
    %c0_5 = arith.constant 0 : index
    %c0_6 = arith.constant 0 : index
    %15 = vector.load %arg6[%c0_5, %c0_6] : memref<8x1xf32, #tpu.memory_space<vmem>>, vector<8x1xf32>
    tpu.vector_store %arg6[%c0_5, %c0_6], %14 {strides = array<i32>} : memref<8x1xf32, #tpu.memory_space<vmem>>, vector<8x1xf32>,
    %16 = vector.broadcast %14 : vector<8x1xf32> to vector<8x10xf32>
    %17 = arith.subf %8, %16 : vector<8x10xf32>
    %18 = math.exp %17 : vector<8x10xf32>
    %cst_7 = arith.constant dense<0.000000e+00> : vector<8xf32>
    %19 = vector.multi_reduction <add>, %18, %cst_7 [1] : vector<8x10xf32> to vector<8xf32>
    %20 = vector.shape_cast %19 : vector<8xf32> to vector<8x1xf32>
    %c0_8 = arith.constant 0 : index
    %c0_9 = arith.constant 0 : index
    %21 = vector.load %arg7[%c0_8, %c0_9] : memref<8x1xf32, #tpu.memory_space<vmem>>, vector<8x1xf32>
    tpu.vector_store %arg7[%c0_8, %c0_9], %20 {strides = array<i32>} : memref<8x1xf32, #tpu.memory_space<vmem>>, vector<8x1xf32>,
    %22 = vector.broadcast %12 : vector<8x1xi32> to vector<8x10xi32>
    %23 = arith.cmpi eq, %9, %22 : vector<8x10xi32>
    %cst_10 = arith.constant 0.000000e+00 : f32
    %24 = vector.broadcast %cst_10 : f32 to vector<8x10xf32>
    %25 = arith.select %23, %8, %24 : vector<8x10xi1>, vector<8x10xf32>
    %cst_11 = arith.constant dense<0.000000e+00> : vector<8xf32>
    %26 = vector.multi_reduction <add>, %25, %cst_11 [1] : vector<8x10xf32> to vector<8xf32>
    %27 = vector.shape_cast %26 : vector<8xf32> to vector<8x1xf32>
    %c0_12 = arith.constant 0 : index
    %c0_13 = arith.constant 0 : index
    %28 = vector.load %arg8[%c0_12, %c0_13] : memref<8x1xf32, #tpu.memory_space<vmem>>, vector<8x1xf32>
    tpu.vector_store %arg8[%c0_12, %c0_13], %27 {strides = array<i32>} : memref<8x1xf32, #tpu.memory_space<vmem>>, vector<8x1xf32>,
    %c0_i32_14 = arith.constant 0 : i32
    %29 = arith.cmpi eq, %arg2, %c0_i32_14 : i32
    %30 = arith.extui %29 : i1 to i32
    %c0_i32_15 = arith.constant 0 : i32
    %31 = arith.cmpi ne, %30, %c0_i32_15 : i32
    scf.if %31 {
      %c0_19 = arith.constant 0 : index
      %c0_20 = arith.constant 0 : index
      %37 = vector.load %arg6[%c0_19, %c0_20] : memref<8x1xf32, #tpu.memory_space<vmem>>, vector<8x1xf32>
      %c0_21 = arith.constant 0 : index
      %c0_22 = arith.constant 0 : index
      %38 = vector.load %arg7[%c0_21, %c0_22] : memref<8x1xf32, #tpu.memory_space<vmem>>, vector<8x1xf32>
      %39 = math.log %38 : vector<8x1xf32>
      %40 = arith.addf %37, %39 : vector<8x1xf32>
      %c0_23 = arith.constant 0 : index
      %c0_24 = arith.constant 0 : index
      %41 = vector.load %arg8[%c0_23, %c0_24] : memref<8x1xf32, #tpu.memory_space<vmem>>, vector<8x1xf32>
      %42 = arith.subf %40, %41 : vector<8x1xf32>
      %c8_i32 = arith.constant 8 : i32
      %43 = arith.muli %6, %c8_i32 : i32
      %44 = tpu.iota {dimensions = array<i32: 0>} : vector<8x1xi32>
      %45 = vector.broadcast %43 : i32 to vector<8x1xi32>
      %46 = arith.addi %45, %44 : vector<8x1xi32>
      %c8_i32_25 = arith.constant 8 : i32
      %47 = vector.broadcast %c8_i32_25 : i32 to vector<8x1xi32>
      %48 = arith.cmpi slt, %46, %47 : vector<8x1xi32>
      %c0_i32_26 = arith.constant 0 : i32
      %49 = vector.broadcast %c0_i32_26 : i32 to vector<8x1xi32>
      %50 = arith.cmpi sge, %7, %49 : vector<8x1xi32>
      %51 = arith.andi %48, %50 : vector<8x1xi1>
      %c10_i32_27 = arith.constant 10 : i32
      %52 = vector.broadcast %c10_i32_27 : i32 to vector<8x1xi32>
      %53 = arith.cmpi slt, %7, %52 : vector<8x1xi32>
      %54 = arith.andi %51, %53 : vector<8x1xi1>
      %c0_28 = arith.constant 0 : index
      %c0_29 = arith.constant 0 : index
      %55 = vector.load %arg9[%c0_28, %c0_29] : memref<8x1xf32, #tpu.memory_space<vmem>>, vector<8x1xf32>
      %cst_30 = arith.constant 0.000000e+00 : f32
      %56 = vector.broadcast %cst_30 : f32 to vector<8x1xf32>
      %57 = arith.select %54, %42, %56 : vector<8x1xi1>, vector<8x1xf32>
      %58 = arith.addf %55, %57 : vector<8x1xf32>
      %c0_31 = arith.constant 0 : index
      %c0_32 = arith.constant 0 : index
      %59 = vector.load %arg9[%c0_31, %c0_32] : memref<8x1xf32, #tpu.memory_space<vmem>>, vector<8x1xf32>
      tpu.vector_store %arg9[%c0_31, %c0_32], %58 {strides = array<i32>} : memref<8x1xf32, #tpu.memory_space<vmem>>, vector<8x1xf32>,
    } else {
    }
    %c0_i32_16 = arith.constant 0 : i32
    %32 = arith.cmpi eq, %arg1, %c0_i32_16 : i32
    %c0_i32_17 = arith.constant 0 : i32
    %33 = arith.cmpi eq, %arg2, %c0_i32_17 : i32
    %34 = arith.andi %32, %33 : i1
    %35 = arith.extui %34 : i1 to i32
    %c0_i32_18 = arith.constant 0 : i32
    %36 = arith.cmpi ne, %35, %c0_i32_18 : i32
    scf.if %36 {
      %c0_19 = arith.constant 0 : index
      %c0_20 = arith.constant 0 : index
      %37 = vector.load %arg9[%c0_19, %c0_20] : memref<8x1xf32, #tpu.memory_space<vmem>>, vector<8x1xf32>
      %38 = vector.shape_cast %37 : vector<8x1xf32> to vector<1x8x1xf32>
      %cst_21 = arith.constant dense<0.000000e+00> : vector<1xf32>
      %39 = vector.multi_reduction <add>, %38, %cst_21 [1, 2] : vector<1x8x1xf32> to vector<1xf32>
      %40 = vector.shape_cast %39 : vector<1xf32> to vector<1x1x1xf32>
      %41 = vector.extract %40[0, 0, 0] : f32 from vector<1x1x1xf32>
      %42 = tpu.iota {dimensions = array<i32: 1>} : vector<1x128xi32>
      %c0_i32_22 = arith.constant 0 : i32
      %43 = vector.broadcast %c0_i32_22 : i32 to vector<1x128xi32>
      %44 = arith.cmpi eq, %42, %43 : vector<1x128xi32>
      %cst_23 = arith.constant 0.000000e+00 : f32
      %45 = vector.broadcast %41 : f32 to vector<1x128xf32>
      %46 = vector.broadcast %cst_23 : f32 to vector<1x128xf32>
      %47 = arith.select %44, %45, %46 : vector<1x128xi1>, vector<1x128xf32>
      %c0_24 = arith.constant 0 : index
      %c0_25 = arith.constant 0 : index
      %48 = vector.load %arg5[%c0_24, %c0_25] : memref<1x128xf32, #tpu.memory_space<vmem>>, vector<1x128xf32>
      tpu.vector_store %arg5[%c0_24, %c0_25], %47 {strides = array<i32>} : memref<1x128xf32, #tpu.memory_space<vmem>>, vector<1x128xf32>,
    } else {
    }
    return
  }
  func.func @transform_0(%arg0: i32, %arg1: i32, %arg2: i32) -> (i32, i32) {
    %c1_i32 = arith.constant 1 : i32
    %0 = arith.muli %arg0, %c1_i32 : i32
    %1 = arith.addi %0, %arg1 : i32
    %c0_i32 = arith.constant 0 : i32
    %2 = arith.minsi %1, %c0_i32 : i32
    %c0_i32_0 = arith.constant 0 : i32
    return %2, %arg2 : i32, i32
  }
  func.func @transform_1(%arg0: i32, %arg1: i32, %arg2: i32) -> (i32, i32) {
    %c1_i32 = arith.constant 1 : i32
    %0 = arith.muli %arg0, %c1_i32 : i32
    %1 = arith.addi %0, %arg1 : i32
    %c0_i32 = arith.constant 0 : i32
    %2 = arith.minsi %1, %c0_i32 : i32
    %c0_i32_0 = arith.constant 0 : i32
    %c0_i32_1 = arith.constant 0 : i32
    return %2, %c0_i32_0 : i32, i32
  }
  func.func @transform_2(%arg0: i32, %arg1: i32, %arg2: i32) -> (i32, i32) {
    %c0_i32 = arith.constant 0 : i32
    %c0_i32_0 = arith.constant 0 : i32
    return %c0_i32, %arg0 : i32, i32
  }
}

</mosaic_0001>

<llo_original>
// kernel: tpu_custom_call.1
$region0: #{tpu_custom_call.1}
  #allocation0 [shape = 'u32[]', space=smem, size = 0x4, offset = 0x4, fixed_abs, tag = 'smem constant byte address 0x4 - core index']
  #allocation1 [shape = 'u32[72,128]{1,0:T(1,128)}', space=vmem, size = 0x9000, scoped, tag = 'internal scratch']
  #allocation2 [shape = 'f32[8,1]{1,0:T(8,128)}', space=vmem, size = 0x1000, scoped, tag = 'scratch operand']
  #allocation3 [shape = 'f32[8,1]{1,0:T(8,128)}', space=vmem, size = 0x1000, scoped, tag = 'scratch operand']
  #allocation4 [shape = 'f32[8,1]{1,0:T(8,128)}', space=vmem, size = 0x1000, scoped, tag = 'scratch operand']
  #allocation5 [shape = 'f32[8,1]{1,0:T(8,128)}', space=vmem, size = 0x1000, scoped, tag = 'scratch operand']
  %s0 = inlined_call_operand.hbm [shape: f32[16,10], index: 0, kind: input, shape index: {}]
  %s1 = inlined_call_operand.vmem [shape: s32[8,1], index: 1, kind: input, shape index: {}]
  %s2 = inlined_call_operand.hbm [shape: f32[1,128], index: 2, kind: output, shape index: {}]
  %s3 = sld [smem:[#allocation0]]
  $region34: #{tpu_custom_call.1} parent=0
    _
  %s5 = ssub.s32 1, %s3
  %s6 = scalar_select 0, %s5, %s3
  $region1: #{tpu_custom_call.1} parent=0
    #allocation6 [shape = 'u8[4096]{0}', space=vmem, size = 0x1000, scoped, tag = 'input window, operand 0, single buffered']
    #allocation7 [shape = 's32[1]{0}', space=sflag, size = 0x4, scoped, tag = 'scoped memory for tpu_custom_call.1']
    #allocation8 [shape = 's32[1]{0}', space=sflag, size = 0x4, scoped, tag = 'scoped memory for tpu_custom_call.1']
    #allocation9 [shape = 'u8[512]{0}', space=vmem, size = 0x400, scoped, tag = 'output window, operand 0, single buffered']
    %7 = vsyncpa [#allocation7], 0
    %8 = vsyncpa [#allocation8], 0
    // Predicated region
    $region2: #{tpu_custom_call.1} parent=1 // pred_check
      _
    $region3: #{tpu_custom_call.1} parent=1 // pred_check_branch
      %10 = sbr.rel (0) target = $region5
    $region4: #{tpu_custom_call.1} parent=1 // pred_region
      %s11 = sadd.s32 0, 0
      %p12 = scmp.lt.s32.totalorder %s11, 0
      %s13 = scalar_select %p12, %s11, 0
      %15 = vsyncadd [#allocation7], 0
      %s16 = smul.addr %s13, 8
      %s17 = scalar_lea.hbm %s0, %s16
      %s19 = sshll.u32 %s17, 4
      %s20 = int_to_ptr.hbm [resolvable:$true] %s19
      %s21 = sshll.u32 [#allocation6], 4
      %s22 = int_to_ptr.vmem [resolvable:$true] %s21
      %24 = dma.hbm_to_vmem [thread:$0]  %s20, 128, %s22, [#allocation7]
    $region5: #{tpu_custom_call.1} parent=1 // pred_fallthru
      _
    // Predicated region
    $region6: #{tpu_custom_call.1} parent=1 // pred_check
      _
    $region7: #{tpu_custom_call.1} parent=1 // pred_check_branch
      %26 = sbr.rel (0) target = $region9
    $region8: #{tpu_custom_call.1} parent=1 // pred_region
      %s27 = sadd.s32 0, 0
      %p28 = scmp.lt.s32.totalorder %s27, 0
      %s29 = scalar_select %p28, %s27, 0
      %p30 = scmp.lt.s32.totalorder %s29, 0
      %s31 = scalar_select %p30, %s29, 0
      %s32 = smul.addr %s31, 8
      %s33 = scalar_lea.vmem %s1, %s32
      %s34 = sadd.s32 0, 0
      %p35 = scmp.lt.s32.totalorder %s34, 0
      %s36 = scalar_select %p35, %s34, 0
    $region9: #{tpu_custom_call.1} parent=1 // pred_fallthru
      _
    // Predicated region
    $region10: #{tpu_custom_call.1} parent=1 // pred_check
      _
    $region11: #{tpu_custom_call.1} parent=1 // pred_check_branch
      %38 = sbr.rel (0) target = $region13
    $region12: #{tpu_custom_call.1} parent=1 // pred_region
      %40 = dma.done [#allocation7], 128
    $region13: #{tpu_custom_call.1} parent=1 // pred_fallthru
      _
    %s41 = sadd.s32 0, 0
    %p42 = scmp.lt.s32.totalorder %s41, 0
    %s43 = scalar_select %p42, %s41, 0
    %p44 = scmp.lt.s32.totalorder %s43, 0
    %s45 = scalar_select %p44, %s43, 0
    %s46 = smul.addr %s45, 8
    %s47 = scalar_lea.vmem %s1, %s46
    %s48 = sadd.s32 0, 0
    %p49 = scmp.lt.s32.totalorder %s48, 0
    %s50 = scalar_select %p49, %s48, 0
    %s51 = sadd.s32 0, 0
    %p52 = scmp.lt.s32.totalorder %s51, 0
    %s53 = scalar_select %p52, %s51, 0
    %p54 = scmp.lt.s32.totalorder %s53, 0
    %s55 = scalar_select %p54, %s53, 0
    %s56 = smul.addr %s55, 8
    %s57 = scalar_lea.vmem %s1, %s56
    %s58 = sadd.s32 0, 0
    %p59 = scmp.lt.s32.totalorder %s58, 0
    %s60 = scalar_select %p59, %s58, 0
    %p61 = scmp.eq.s32.totalorder 0, 0
    %p62 = scmp.eq.s32.totalorder 0, 0
    %p63 = pnand %p61, %p62
    %p64 = pneg %p63
    // Predicated region
    $region14: #{tpu_custom_call.1} parent=1 // pred_check
      _
    $region15: #{tpu_custom_call.1} parent=1 // pred_check_branch
      %66 = sbr.rel (%p63) target = $region17
    $region16: #{tpu_custom_call.1} parent=1 // pred_region
      %vm67 = vcmask 7168
      %68 = vst.msk [vmem:[#allocation5] sm:$0xff] %vm67, 0.0
    $region17: #{tpu_custom_call.1} parent=1 // pred_fallthru
      _
    %s69 = sadd.s32 0, 0
    %v70 = vld [vmem:[%s57] sm:$0xff]
    %v71 = vld [vmem:[#allocation6] sm:$0xff]
    %v72 = vlaneseq
    %v73 = vand.u32 %v72, 127
    %s74 = smul.u32 0, 10
    %v75 = vstv %s74
    %v76 = vsub.s32 %v70, %v75
    %vm77 = vcmask 80896
    %v78 = vsel %vm77, %v71, -inf
    %79 = vmax.xlane.f32.xlu0 %v78
    %v80 = vpop.xlane.xlu0 %79
    %vm81 = vcmask 7168
    %82 = vst.msk [vmem:[#allocation2] sm:$0xff] %vm81, %v80
    %v83 = vsub.f32 %v71, %v80
    %v84 = vmul.f32 %v83, 1.442695
    %v85 = vpow.pop %v84
    %v86 = vsel %vm77, %v85, 0.0
    %87 = vadd.xlane.f32.xlu0 %v86
    %v88 = vpop.xlane.xlu0 %87
    %89 = vst.msk [vmem:[#allocation3] sm:$0xff] %vm81, %v88
    %90 = vset.pattern.permute.xlu0 0
    %91 = vperm.xlu0 %90, %v76
    %v92 = vpop.permute.xlu0 %91
    %vm93 = vcmp.eq.s32.totalorder %v73, %v92
    %v94 = vsel %vm93, %v71, 0.0
    %v95 = vsel %vm77, %v94, 0.0
    %96 = vadd.xlane.f32.xlu0 %v95
    %v97 = vpop.xlane.xlu0 %96
    %98 = vst.msk [vmem:[#allocation4] sm:$0xff] %vm81, %v97
    // Predicated region
    $region18: #{tpu_custom_call.1} parent=1 // pred_check
      %p99 = pneg %p62
    $region19: #{tpu_custom_call.1} parent=1 // pred_check_branch
      %101 = sbr.rel (%p99) target = $region21
    $region20: #{tpu_custom_call.1} parent=1 // pred_region
      %v102 = vld [vmem:[#allocation2] sm:$0xff]
      %v103 = vld [vmem:[#allocation3] sm:$0xff]
      %v104 = vlog2.pop %v103
      %v105 = vmul.f32 %v104, 0.6931472
      %v106 = vadd.f32 %v102, %v105
      %v107 = vld [vmem:[#allocation4] sm:$0xff]
      %v108 = vsub.f32 %v106, %v107
      %s109 = smul.u32 %s69, 8
      %v110 = vlaneseq
      %v111 = vshrl.u32 %v110, 7
      %v112 = vstv %s109
      %v113 = vadd.s32 %v112, %v111
      %vm114 = vcmp.lt.s32.totalorder %v113, 8
      %vm115 = vcmp.ge.s32.totalorder %v70, 0
      %vm116 = vmand %vm114, %vm115
      %vm117 = vcmp.lt.s32.totalorder %v70, 10
      %vm118 = vmand %vm116, %vm117
      %v119 = vld [vmem:[#allocation5] sm:$0xff]
      %v120 = vsel %vm118, %v108, 0.0
      %v121 = vadd.f32 %v119, %v120
      %122 = vst.msk [vmem:[#allocation5] sm:$0xff] %vm81, %v121
    $region21: #{tpu_custom_call.1} parent=1 // pred_fallthru
      _
    // Predicated region
    $region22: #{tpu_custom_call.1} parent=1 // pred_check
      _
    $region23: #{tpu_custom_call.1} parent=1 // pred_check_branch
      %124 = sbr.rel (%p63) target = $region25
    $region24: #{tpu_custom_call.1} parent=1 // pred_region
      %v125 = vld [vmem:[#allocation5] sm:$0xff]
      %v126 = vsel %vm81, %v125, 0.0
      %127 = vadd.xlane.f32.xlu0 %v126
      %v128 = vpop.xlane.xlu0 %127
      %v129 = vrot.slane %v128, 4
      %v130 = vadd.f32 %v128, %v129
      %v131 = vrot.slane %v130, 2
      %v132 = vadd.f32 %v130, %v131
      %v133 = vrot.slane %v132, 1
      %v134 = vadd.f32 %v132, %v133
      %s135 = vtos %v134
      %vm136 = vcmp.eq.s32.totalorder %v73, 0
      %v137 = vstv %s135
      %v138 = vsel %vm136, %v137, 0.0
      %139 = vst [vmem:[#allocation9] sm:$0x1] %v138
    $region25: #{tpu_custom_call.1} parent=1 // pred_fallthru
      _
    // Predicated region
    $region26: #{tpu_custom_call.1} parent=1 // pred_check
      _
    $region27: #{tpu_custom_call.1} parent=1 // pred_check_branch
      %141 = sbr.rel (0) target = $region29
    $region28: #{tpu_custom_call.1} parent=1 // pred_region
      %143 = vsyncadd [#allocation8], 0
      %s145 = sshll.u32 [#allocation9], 4
      %s146 = int_to_ptr.vmem [resolvable:$true] %s145
      %s147 = sshll.u32 %s2, 4
      %s148 = int_to_ptr.hbm [resolvable:$true] %s147
      %150 = dma.vmem_to_hbm [thread:$0]  %s146, 16, %s148, [#allocation8]
    $region29: #{tpu_custom_call.1} parent=1 // pred_fallthru
      _
    // Predicated region
    $region30: #{tpu_custom_call.1} parent=1 // pred_check
      _
    $region31: #{tpu_custom_call.1} parent=1 // pred_check_branch
      %152 = sbr.rel (0) target = $region33
    $region32: #{tpu_custom_call.1} parent=1 // pred_region
      %154 = dma.done [#allocation8], 16
    $region33: #{tpu_custom_call.1} parent=1 // pred_fallthru
      _
    %155 = vsyncpa [#allocation7], 1
    %156 = vsyncpa [#allocation8], 1

</llo_original>
